<compile_context>
chip_gen: v7x
topology: tpu7x:2x2x1
jax: 0.10.0
libtpu: 0.0.40
codegen_flags: <defaults>
</compile_context>

<pallas_src>
from functools import lru_cache

import jax
import jax.numpy as jnp
from jax.experimental import pallas as pl
from jax.experimental.pallas import tpu as pltpu

_LANE = 128            # fixed lane width; every block DMA is one contiguous slab
_MIN_GRID_STEPS = 4    # >= 2 grid steps per TensorCore on v7x
_MIN_SPLIT_BYTES = 4 << 20   # arrays this big always get >= _MIN_GRID_STEPS blocks


def _star_relu_kernel(scale_ref, bias_ref, x_ref, o_ref):
    # scale/bias are (1,) f32 scalars in SMEM (matching PyTorch's f32 params).
    s = scale_ref[0]
    b = bias_ref[0]
    x = x_ref[...].astype(jnp.float32)
    r = jnp.maximum(x, 0.0)
    o_ref[...] = (s * (r * r) + b).astype(o_ref.dtype)


@lru_cache(maxsize=1)
def _tpu_block_config():
    """Per-generation (combined in+out bytes per grid step, vmem_limit_bytes)."""
    kind = ""
    try:
        kind = jax.devices()[0].device_kind.lower()
    except Exception:  # pragma: no cover - defensive; fall through to defaults
        pass
    vmem_cap = 128 << 20
    try:
        vmem_cap = pltpu.get_tpu_info().vmem_capacity_bytes
    except Exception:  # pragma: no cover
        pass

    if "v7" in kind or vmem_cap <= (64 << 20):
        # v7x: ~3.2 TB/s HBM -> bigger steps amortize the ~0.35us/step cost.
        # 16 MiB in+out per step -> double-buffered footprint 32 MiB <= 40 MiB
        # limit, well inside the 64 MiB physical VMEM.
        return 16 << 20, 40 << 20
    if "v5" in kind and ("lite" in kind or "v5e" in kind):
        # v5e: ~820 GB/s -> 2 MiB input tiles already amortize per-step cost;
        # 4 x 2 MiB footprint stays inside the 16 MiB scoped-VMEM default.
        return 4 << 20, None
    # v6e (and anything else): ~4 MiB input tiles, 16 MiB footprint inside the
    # 32 MiB scoped-VMEM default.
    return 8 << 20, None


def _choose_block_rows(rows, row_bytes, step_bytes):
    """Rows per block: a multiple of 8 (sublane) unless it equals the full extent."""
    budget = max(8, (step_bytes // row_bytes) // 8 * 8)
    if rows * row_bytes >= _MIN_SPLIT_BYTES:
        # Keep >= _MIN_GRID_STEPS steps so both v7x TCs get work and the DMA
        # pipeline stays warm (avoids the grid=(1,) trap for mid-sized arrays).
        per_step = -(-rows // _MIN_GRID_STEPS)      # cdiv
        per_step = -(-per_step // 8) * 8            # round up to sublane multiple
        budget = min(budget, per_step)
    if budget >= rows:
        return rows                                 # single full-extent block
    return budget


def _star_relu_2d(x2d, scale_f32, bias_f32, out_dtype, donate_input):
    """Run the kernel over a (rows, 128) slab."""
    rows, lane = x2d.shape
    row_bytes = lane * (jnp.dtype(x2d.dtype).itemsize + jnp.dtype(out_dtype).itemsize)
    step_bytes, vmem_limit = _tpu_block_config()
    block_rows = _choose_block_rows(rows, row_bytes, step_bytes)
    grid = (pl.cdiv(rows, block_rows),)

    # Only alias when the caller explicitly donates x (otherwise XLA would have
    # to insert a defensive copy, adding a full HBM pass) and dtypes match.
    io_aliases = {}
    if donate_input and jnp.dtype(x2d.dtype) == jnp.dtype(out_dtype):
        io_aliases = {2: 0}   # x is the third pallas_call operand

    return pl.pallas_call(
        _star_relu_kernel,
        out_shape=jax.ShapeDtypeStruct((rows, lane), out_dtype),
        grid_spec=pltpu.PrefetchScalarGridSpec(
            num_scalar_prefetch=0,
            grid=grid,
            in_specs=[
                pl.BlockSpec(memory_space=pltpu.SMEM),   # scale, (1,) f32
                pl.BlockSpec(memory_space=pltpu.SMEM),   # bias,  (1,) f32
                pl.BlockSpec((block_rows, lane), lambda i: (i, 0)),
            ],
            out_specs=pl.BlockSpec((block_rows, lane), lambda i: (i, 0)),
        ),
        compiler_params=pltpu.CompilerParams(
            dimension_semantics=("parallel",),   # shards steps over both v7x TCs
            vmem_limit_bytes=vmem_limit,
        ),
        input_output_aliases=io_aliases,
    )(scale_f32, bias_f32, x2d)


def star_relu(x, scale, bias, *, donate_input=False):
    """Elementwise StarReLU: scale * relu(x)**2 + bias.

    Output dtype follows PyTorch promotion (f32 params promote half inputs to f32).
    Set donate_input=True only if the caller donates x (enables buffer reuse).
    """
    out_dtype = jnp.result_type(x.dtype, jnp.float32)
    scale_f32 = jnp.asarray(scale, dtype=jnp.float32).reshape(1)
    bias_f32 = jnp.asarray(bias, dtype=jnp.float32).reshape(1)

    total = x.size
    if total == 0 or total % _LANE != 0:
        # Ragged / tiny sizes: a single fused XLA elementwise op is already at
        # the HBM roofline for this 3-op formula and avoids the extra slice +
        # concatenate HBM passes a split main+tail kernel path would cost.
        r = jnp.maximum(x.astype(jnp.float32), 0.0)
        return (scale_f32[0] * (r * r) + bias_f32[0]).astype(out_dtype)

    rows = total // _LANE
    x2d = x.reshape(rows, _LANE)   # free bitcast for contiguous row-major x
    out2d = _star_relu_2d(x2d, scale_f32, bias_f32, out_dtype, donate_input)
    return out2d.reshape(x.shape)


class StarReLUPallas:
    """Mirror of the PyTorch StarReLU module (scale/bias are 1-element f32
    parameters, exactly like nn.Parameter(torch.ones(1)))."""

    def __init__(self, scale_value=1.0, bias_value=0.0):
        self.scale = jnp.ones((1,), dtype=jnp.float32) * scale_value
        self.bias = jnp.ones((1,), dtype=jnp.float32) * bias_value

    def __call__(self, x, donate_input=False):
        return star_relu(x, self.scale, self.bias, donate_input=donate_input)


if __name__ == "__main__":
    key = jax.random.PRNGKey(0)
    mod = StarReLUPallas(scale_value=0.8944, bias_value=-0.4472)

    # 1) Main test: NCHW f32 feature map (2048 elements -> kernel path).
    x = jax.random.normal(key, (2, 4, 16, 16), dtype=jnp.float32)
    out = jax.block_until_ready(mod(x))
    ref = mod.scale[0] * jnp.maximum(x, 0.0) ** 2 + mod.bias[0]
    assert out.shape == x.shape and out.dtype == x.dtype
    assert jnp.allclose(out, ref, atol=1e-6, rtol=1e-6)

    # 2) bf16 input: PyTorch's f32 parameters promote the result to f32.
    xb = x.astype(jnp.bfloat16)
    outb = jax.block_until_ready(mod(xb))
    refb = mod.scale[0] * jnp.maximum(xb.astype(jnp.float32), 0.0) ** 2 + mod.bias[0]
    assert outb.dtype == jnp.float32 and outb.shape == xb.shape
    assert jnp.allclose(outb, refb, atol=1e-6, rtol=1e-6)

    # 3) Ragged total (105 elements, not a multiple of 128): fused-jnp fallback.
    xr = jax.random.normal(jax.random.PRNGKey(1), (3, 5, 7), dtype=jnp.float32)
    outr = jax.block_until_ready(mod(xr))
    refr = mod.scale[0] * jnp.maximum(xr, 0.0) ** 2 + mod.bias[0]
    assert outr.shape == xr.shape
    assert jnp.allclose(outr, refr, atol=1e-6, rtol=1e-6)

    print("KERNEL_OK")
</pallas_src>

<mosaic_0001>
module attributes {stable_mosaic.version = 11 : i64} {
  func.func @_star_relu_kernel(%arg0: i32, %arg1: memref<1xf32, #tpu.memory_space<smem>>, %arg2: memref<1xf32, #tpu.memory_space<smem>>, %arg3: memref<16x128xf32, #tpu.memory_space<vmem>>, %arg4: memref<16x128xf32, #tpu.memory_space<vmem>>) attributes {dimension_semantics = [#tpu.dimension_semantics<parallel>], iteration_bounds = array<i64: 1>, scalar_prefetch = 0 : i64, scratch_operands = 0 : i64, tpu.core_type = #tpu.core_type<tc>, window_params = [{transform_indices = @transform_0, window_bounds = array<i64: 1>}, {transform_indices = @transform_1, window_bounds = array<i64: 1>}, {transform_indices = @transform_2, window_bounds = array<i64: 16, 128>}, {transform_indices = @transform_3, window_bounds = array<i64: 16, 128>}]} {
    %c0 = arith.constant 0 : index
    %0 = memref.load %arg1[%c0] : memref<1xf32, #tpu.memory_space<smem>>
    %c0_0 = arith.constant 0 : index
    %1 = memref.load %arg2[%c0_0] : memref<1xf32, #tpu.memory_space<smem>>
    %c0_1 = arith.constant 0 : index
    %c0_2 = arith.constant 0 : index
    %2 = vector.load %arg3[%c0_1, %c0_2] : memref<16x128xf32, #tpu.memory_space<vmem>>, vector<16x128xf32>
    %cst = arith.constant 0.000000e+00 : f32
    %3 = vector.broadcast %cst : f32 to vector<16x128xf32>
    %4 = arith.maximumf %2, %3 : vector<16x128xf32>
    %5 = arith.mulf %4, %4 : vector<16x128xf32>
    %6 = vector.broadcast %0 : f32 to vector<16x128xf32>
    %7 = arith.mulf %6, %5 : vector<16x128xf32>
    %8 = vector.broadcast %1 : f32 to vector<16x128xf32>
    %9 = arith.addf %7, %8 : vector<16x128xf32>
    %c0_3 = arith.constant 0 : index
    %c0_4 = arith.constant 0 : index
    %10 = vector.load %arg4[%c0_3, %c0_4] : memref<16x128xf32, #tpu.memory_space<vmem>>, vector<16x128xf32>
    tpu.vector_store %arg4[%c0_3, %c0_4], %9 {strides = array<i32>} : memref<16x128xf32, #tpu.memory_space<vmem>>, vector<16x128xf32>,
    return
  }
  func.func @transform_0(%arg0: i32) -> i32 {
    %c0_i32 = arith.constant 0 : i32
    %c0_i32_0 = arith.constant 0 : i32
    return %c0_i32 : i32
  }
  func.func @transform_1(%arg0: i32) -> i32 {
    %c0_i32 = arith.constant 0 : i32
    %c0_i32_0 = arith.constant 0 : i32
    return %c0_i32 : i32
  }
  func.func @transform_2(%arg0: i32) -> (i32, i32) {
    %c0_i32 = arith.constant 0 : i32
    %c0_i32_0 = arith.constant 0 : i32
    return %arg0, %c0_i32 : i32, i32
  }
  func.func @transform_3(%arg0: i32) -> (i32, i32) {
    %c0_i32 = arith.constant 0 : i32
    %c0_i32_0 = arith.constant 0 : i32
    return %arg0, %c0_i32 : i32, i32
  }
}

</mosaic_0001>

<llo_original>
// kernel: tpu_custom_call.1
$region0: #{tpu_custom_call.1}
  #allocation0 [shape = 'u32[]', space=smem, size = 0x4, offset = 0x4, fixed_abs, tag = 'smem constant byte address 0x4 - core index']
  #allocation1 [shape = 'u32[144,128]{1,0:T(1,128)}', space=vmem, size = 0x12000, scoped, tag = 'internal scratch']
  #allocation2 [shape = 'f32[1]{0:T(128)S(6)}', space=smem, size = 0x200, scoped, tag = 'scoped memory for tpu_custom_call.1']
  #allocation3 [shape = 'f32[1]{0:T(128)S(6)}', space=smem, size = 0x200, scoped, tag = 'scoped memory for tpu_custom_call.1']
  %s0 = inlined_call_operand.<no memory space> [shape: f32[1], index: 0, kind: input, shape index: {}]
  %s1 = inlined_call_operand.<no memory space> [shape: f32[1], index: 1, kind: input, shape index: {}]
  %s2 = inlined_call_operand.hbm [shape: f32[16,128], index: 2, kind: input, shape index: {}]
  %s3 = inlined_call_operand.hbm [shape: f32[16,128], index: 3, kind: output, shape index: {}]
  %s4 = sld [smem:[#allocation0]]
  $region26: #{tpu_custom_call.1} parent=0
    _
  %s6 = ssub.s32 1, %s4
  %s7 = scalar_select 0, %s6, %s4
  %8 = sst [smem:[#allocation2]] %s0
  %9 = sst [smem:[#allocation3]] %s1
  $region1: #{tpu_custom_call.1} parent=0
    #allocation4 [shape = 'u8[8192]{0}', space=vmem, size = 0x2000, scoped, tag = 'input window, operand 2, single buffered']
    #allocation5 [shape = 's32[1]{0}', space=sflag, size = 0x4, scoped, tag = 'scoped memory for tpu_custom_call.1']
    #allocation6 [shape = 's32[1]{0}', space=sflag, size = 0x4, scoped, tag = 'scoped memory for tpu_custom_call.1']
    #allocation7 [shape = 'u8[8192]{0}', space=vmem, size = 0x2000, scoped, tag = 'output window, operand 0, single buffered']
    %10 = vsyncpa [#allocation5], 0
    %11 = vsyncpa [#allocation6], 0
    // Predicated region
    $region2: #{tpu_custom_call.1} parent=1 // pred_check
      _
    $region3: #{tpu_custom_call.1} parent=1 // pred_check_branch
      %13 = sbr.rel (0) target = $region5
    $region4: #{tpu_custom_call.1} parent=1 // pred_region
      _
    $region5: #{tpu_custom_call.1} parent=1 // pred_fallthru
      _
    // Predicated region
    $region6: #{tpu_custom_call.1} parent=1 // pred_check
      _
    $region7: #{tpu_custom_call.1} parent=1 // pred_check_branch
      %15 = sbr.rel (0) target = $region9
    $region8: #{tpu_custom_call.1} parent=1 // pred_region
      _
    $region9: #{tpu_custom_call.1} parent=1 // pred_fallthru
      _
    // Predicated region
    $region10: #{tpu_custom_call.1} parent=1 // pred_check
      _
    $region11: #{tpu_custom_call.1} parent=1 // pred_check_branch
      %17 = sbr.rel (0) target = $region13
    $region12: #{tpu_custom_call.1} parent=1 // pred_region
      %s19 = ssub.s32 256, 256
      %20 = vsyncadd [#allocation5], %s19
      %s21 = sshll.u32 [#allocation4], 4
      %s22 = int_to_ptr.vmem [resolvable:$true] %s21
      %27 = dma.hbm_to_vmem [thread:$0]  %s2, 256, %s22, [#allocation5], 128, 128, 8
    $region13: #{tpu_custom_call.1} parent=1 // pred_fallthru
      _
    // Predicated region
    $region14: #{tpu_custom_call.1} parent=1 // pred_check
      _
    $region15: #{tpu_custom_call.1} parent=1 // pred_check_branch
      %29 = sbr.rel (0) target = $region17
    $region16: #{tpu_custom_call.1} parent=1 // pred_region
      %30 = dma.done [#allocation5], 256
    $region17: #{tpu_custom_call.1} parent=1 // pred_fallthru
      _
    %s31 = sld [smem:[#allocation2]]
    %s32 = sld [smem:[#allocation3]]
    %v33 = vld [vmem:[#allocation4] sm:$0xff]
    %v34 = vld [vmem:[#allocation4 + $0x8] sm:$0xff]
    %v35 = vmax.f32 %v33, 0.0
    %v36 = vmax.f32 %v34, 0.0
    %v37 = vmul.f32 %v35, %v35
    %v38 = vmul.f32 %v36, %v36
    %v39 = vstv %s31
    %v40 = vmul.f32 %v39, %v37
    %v41 = vmul.f32 %v39, %v38
    %v42 = vstv %s32
    %v43 = vadd.f32 %v40, %v42
    %v44 = vadd.f32 %v41, %v42
    %45 = vst [vmem:[#allocation7] sm:$0xff] %v43
    %46 = vst [vmem:[#allocation7 + $0x8] sm:$0xff] %v44
    // Predicated region
    $region18: #{tpu_custom_call.1} parent=1 // pred_check
      _
    $region19: #{tpu_custom_call.1} parent=1 // pred_check_branch
      %48 = sbr.rel (0) target = $region21
    $region20: #{tpu_custom_call.1} parent=1 // pred_region
      %s50 = ssub.s32 256, 256
      %51 = vsyncadd [#allocation6], %s50
      %s52 = sshll.u32 [#allocation7], 4
      %s53 = int_to_ptr.vmem [resolvable:$true] %s52
      %58 = dma.vmem_to_hbm [thread:$0]  %s53, 256, %s3, [#allocation6], 128, 128, 8
    $region21: #{tpu_custom_call.1} parent=1 // pred_fallthru
      _
    // Predicated region
    $region22: #{tpu_custom_call.1} parent=1 // pred_check
      _
    $region23: #{tpu_custom_call.1} parent=1 // pred_check_branch
      %60 = sbr.rel (0) target = $region25
    $region24: #{tpu_custom_call.1} parent=1 // pred_region
      %61 = dma.done [#allocation6], 256
    $region25: #{tpu_custom_call.1} parent=1 // pred_fallthru
      _
    %62 = vsyncpa [#allocation5], 1
    %63 = vsyncpa [#allocation6], 1

</llo_original>
